<compile_context>
chip_gen: v7x
topology: tpu7x:2x2x1
jax: 0.10.0
libtpu: 0.0.40
codegen_flags: <defaults>
</compile_context>

<pallas_src>
import functools

import jax
import jax.numpy as jnp
from jax import lax
from jax.experimental import pallas as pl
from jax.experimental.pallas import tpu as pltpu

_LANES = 128        # lane width (last dim of the kernel view)
_MAX_TILE_R = 4096  # rows per grid step (4096 x 128 f32 = 2 MiB per input tile)
_VMEM_LIMIT = 32 * 1024 * 1024   # raises v5e's 16 MiB scoped default; safe on v7x (64 MiB phys)


def _round_up(a, b):
    return (a + b - 1) // b * b


def _num_tensorcores():
    """Best-effort TensorCores-per-chip query (2 on v7x, 1 on v5e/v6e)."""
    try:
        info = pltpu.get_tpu_info()
        for attr in ("tensorcores_per_chip", "num_tensorcores_per_chip",
                     "cores_per_chip", "num_cores_per_chip"):
            v = getattr(info, attr, None)
            if isinstance(v, int) and 1 <= v <= 4:
                return v
    except Exception:
        pass
    try:
        if "v7" in jax.devices()[0].device_kind.lower():
            return 2
    except Exception:
        pass
    return 1


def _balance_bce_partial_kernel(w_ref, x_ref, t_ref, out_ref, acc_ref, *,
                                blocks_per_core, tile_r, n_valid_rows,
                                apply_mask, targets_are_binary):
    i = pl.program_id(1)

    @pl.when(i == 0)
    def _init():
        acc_ref[...] = jnp.zeros_like(acc_ref)

    w = w_ref[0]                               # scalar weight_zero from SMEM
    x = x_ref[...].astype(jnp.float32)         # cast in-kernel (no host-side astype copy)
    t = t_ref[...].astype(jnp.float32)

    if apply_mask:
        # Tail block(s): replace rows past the logical end of the input with
        # x=1, t=1 (exactly zero loss) *before* any log so stale out-of-bounds
        # VMEM can never produce NaNs.
        row_start = (pl.program_id(0) * blocks_per_core + i) * tile_r
        rows = lax.broadcasted_iota(jnp.int32, x.shape, 0)
        valid = rows < (n_valid_rows - row_start)
        x = jnp.where(valid, x, 1.0)
        t = jnp.where(valid, t, 1.0)

    if targets_are_binary:
        # Fast path (hard {0,1} targets): one transcendental per element.
        pos = t > 0.5
        log_p = jnp.maximum(jnp.log(jnp.where(pos, x, 1.0 - x)), -100.0)
        loss = -log_p * jnp.where(pos, 1.0 - w, w)
    else:
        # General (soft-target) path, matching torch.F.binary_cross_entropy:
        # each log term is clamped at -100 before being combined.
        log_x = jnp.maximum(jnp.log(x), -100.0)
        log_1mx = jnp.maximum(jnp.log1p(-x), -100.0)
        bce = -(t * log_x + (1.0 - t) * log_1mx)
        coef = w + t * (1.0 - 2.0 * w)         # == t*(1-w) + (1-t)*w, scalar hoisted
        loss = bce * coef

    # Pure elementwise (VALU) accumulate — no per-step cross-lane reduction.
    acc_ref[...] += loss

    @pl.when(i == pl.num_programs(1) - 1)
    def _finalize():
        # Single cross-sublane reduction per core; lanes are summed in the wrapper.
        out_ref[...] = jnp.sum(acc_ref[...], axis=0, keepdims=True)[None]


def balance_bce(x, target, weight_zero, reduction=None, targets_are_binary=None):
    """Pallas implementation of BalanceBCE.forward (reduction=None -> global mean)."""
    assert x.shape == target.shape
    if reduction is not None:
        # TODO(synk): reduction='per_batch' (mean over non-batch dims) not implemented in-kernel.
        raise NotImplementedError("only reduction=None is supported")

    if targets_are_binary is None:
        targets_are_binary = (target.dtype == jnp.bool_ or
                              jnp.issubdtype(target.dtype, jnp.integer))
    if target.dtype == jnp.bool_:
        target = target.astype(jnp.int8)       # 1 B/elem HBM traffic, avoids i1 loads

    n_valid = x.size
    xf = x.reshape(-1)
    tf = target.reshape(-1)

    rem = n_valid % _LANES
    if rem:
        # TODO(synk): sizes that are not a multiple of 128 still pay one pad copy
        # (needed to form the lane-dense (rows, 128) view).  Pad value 1 -> zero loss.
        pad = _LANES - rem
        xf = jnp.pad(xf, (0, pad), constant_values=1)
        tf = jnp.pad(tf, (0, pad), constant_values=1)
    n_rows = xf.size // _LANES
    xf = xf.reshape(n_rows, _LANES)
    tf = tf.reshape(n_rows, _LANES)

    # Sublane multiple for the narrowest dtype flowing through the BlockSpecs.
    itemsize = min(xf.dtype.itemsize, tf.dtype.itemsize)
    sub_mult = {4: 8, 2: 16, 1: 32}.get(int(itemsize), 8)

    if n_rows <= sub_mult:
        # Tiny input: one full-array block (block_shape == array dims is always legal).
        n_splits, blocks_per_core, tile_r = 1, 1, n_rows
    else:
        n_splits = _num_tensorcores()
        if n_rows < n_splits * sub_mult:
            n_splits = 1
        per_core = pl.cdiv(n_rows, n_splits)
        tile_r = min(_MAX_TILE_R, _round_up(per_core, sub_mult))
        tile_r = min(tile_r, (n_rows // sub_mult) * sub_mult)   # keep block <= array rows
        blocks_per_core = pl.cdiv(n_rows, n_splits * tile_r)
        # Shrink the tile to the minimum that still covers with the same block count
        # (keeps the masked tail small for odd sizes).
        t2 = _round_up(pl.cdiv(n_rows, n_splits * blocks_per_core), sub_mult)
        tile_r = max(sub_mult, min(tile_r, t2))
    grid_rows = n_splits * blocks_per_core * tile_r
    apply_mask = grid_rows != n_rows

    w_arr = jnp.asarray(weight_zero, dtype=jnp.float32).reshape((1,))

    kernel = functools.partial(
        _balance_bce_partial_kernel,
        blocks_per_core=blocks_per_core, tile_r=tile_r, n_valid_rows=n_rows,
        apply_mask=apply_mask, targets_are_binary=targets_are_binary)

    def _call(first_axis_semantics):
        data_spec = pl.BlockSpec(
            (tile_r, _LANES), lambda c, i: (c * blocks_per_core + i, 0))
        return pl.pallas_call(
            kernel,
            out_shape=jax.ShapeDtypeStruct((n_splits, 1, _LANES), jnp.float32),
            grid_spec=pltpu.PrefetchScalarGridSpec(
                num_scalar_prefetch=0,
                grid=(n_splits, blocks_per_core),
                in_specs=[
                    pl.BlockSpec(memory_space=pltpu.MemorySpace.SMEM),  # weight_zero
                    data_spec,   # x
                    data_spec,   # target
                ],
                out_specs=pl.BlockSpec((1, 1, _LANES), lambda c, i: (c, 0, 0)),
                scratch_shapes=[pltpu.VMEM((tile_r, _LANES), jnp.float32)],
            ),
            compiler_params=pltpu.CompilerParams(
                dimension_semantics=(first_axis_semantics, pltpu.ARBITRARY),
                vmem_limit_bytes=_VMEM_LIMIT),
        )(w_arr, xf, tf)

    if n_splits > 1:
        # Explicit per-TensorCore sharding of the streaming reduction on dual-core
        # chips (v7x); fall back to plain PARALLEL if CORE_PARALLEL is rejected.
        try:
            partials = _call(pltpu.CORE_PARALLEL)
        except Exception:
            partials = _call(pltpu.PARALLEL)
    else:
        partials = _call(pltpu.PARALLEL)

    return jnp.sum(partials) / jnp.float32(n_valid)


def _balance_bce_ref(x, target, weight_zero):
    x = x.astype(jnp.float32)
    t = target.astype(jnp.float32)
    log_x = jnp.maximum(jnp.log(x), -100.0)
    log_1mx = jnp.maximum(jnp.log1p(-x), -100.0)
    bce = -(t * log_x + (1.0 - t) * log_1mx)
    coef = t * (1.0 - weight_zero) + (1.0 - t) * weight_zero
    return jnp.mean(bce * coef)


if __name__ == "__main__":
    key = jax.random.PRNGKey(0)
    kx, kt, kx2, kt2 = jax.random.split(key, 4)

    weight_zero = 0.3                   # scalar weight_zero "parameter"

    # 1) NCHW shape matching the PyTorch convention; probabilities + hard float targets.
    N, C, H, W = 2, 4, 16, 16
    x = jax.nn.sigmoid(jax.random.normal(kx, (N, C, H, W), dtype=jnp.float32))
    target = jax.random.bernoulli(kt, p=0.3, shape=(N, C, H, W)).astype(jnp.float32)

    ref = _balance_bce_ref(x, target, weight_zero)
    out = jax.block_until_ready(balance_bce(x, target, weight_zero))
    assert jnp.allclose(out, ref, rtol=1e-5, atol=1e-6), (out, ref)

    # Opt-in binary-target fast path (targets here are hard {0,1} floats).
    out_fast = jax.block_until_ready(
        balance_bce(x, target, weight_zero, targets_are_binary=True))
    assert jnp.allclose(out_fast, ref, rtol=1e-5, atol=1e-5), (out_fast, ref)

    # 2) Odd row count (3*5*7 rows of 128): exercises the in-kernel tail-row masking
    #    path (no host-side pad copy), with soft targets on the general path.
    x2 = jax.nn.sigmoid(jax.random.normal(kx2, (3, 5, 7, 128), dtype=jnp.float32))
    t2 = jax.nn.sigmoid(jax.random.normal(kt2, (3, 5, 7, 128), dtype=jnp.float32))
    ref2 = _balance_bce_ref(x2, t2, weight_zero)
    out2 = jax.block_until_ready(balance_bce(x2, t2, weight_zero))
    assert jnp.allclose(out2, ref2, rtol=1e-5, atol=1e-6), (out2, ref2)

    # 3) Element count not a multiple of 128 (rare pad fallback, single tiny block).
    x3 = jax.nn.sigmoid(jax.random.normal(kx, (2, 3, 5, 7), dtype=jnp.float32))
    t3 = jax.random.bernoulli(kt, p=0.5, shape=(2, 3, 5, 7)).astype(jnp.float32)
    ref3 = _balance_bce_ref(x3, t3, weight_zero)
    out3 = jax.block_until_ready(balance_bce(x3, t3, weight_zero))
    assert jnp.allclose(out3, ref3, rtol=1e-5, atol=1e-6), (out3, ref3)

    print("KERNEL_OK")
</pallas_src>

<mosaic_0001>
module attributes {stable_mosaic.version = 11 : i64} {
  func.func @_balance_bce_partial_kernel(%arg0: i32, %arg1: i32, %arg2: memref<1xf32, #tpu.memory_space<smem>>, %arg3: memref<16x128xf32, #tpu.memory_space<vmem>>, %arg4: memref<16x128xf32, #tpu.memory_space<vmem>>, %arg5: memref<1x1x128xf32, #tpu.memory_space<vmem>>, %arg6: memref<16x128xf32, #tpu.memory_space<vmem>>) attributes {dimension_semantics = [#tpu.dimension_semantics<parallel>, #tpu.dimension_semantics<arbitrary>], iteration_bounds = array<i64: 1, 1>, scalar_prefetch = 0 : i64, scratch_operands = 1 : i64, tpu.core_type = #tpu.core_type<tc>, window_params = [{transform_indices = @transform_0, window_bounds = array<i64: 1>}, {transform_indices = @transform_1, window_bounds = array<i64: 16, 128>}, {transform_indices = @transform_2, window_bounds = array<i64: 16, 128>}, {transform_indices = @transform_3, window_bounds = array<i64: 1, 1, 128>}]} {
    %c0_i32 = arith.constant 0 : i32
    %0 = arith.cmpi eq, %arg1, %c0_i32 : i32
    %1 = arith.extui %0 : i1 to i32
    %c0_i32_0 = arith.constant 0 : i32
    %2 = arith.cmpi ne, %1, %c0_i32_0 : i32
    scf.if %2 {
      %cst_17 = arith.constant 0.000000e+00 : f32
      %34 = vector.broadcast %cst_17 : f32 to vector<16x128xf32>
      %c0_18 = arith.constant 0 : index
      %c0_19 = arith.constant 0 : index
      %35 = vector.load %arg6[%c0_18, %c0_19] : memref<16x128xf32, #tpu.memory_space<vmem>>, vector<16x128xf32>
      tpu.vector_store %arg6[%c0_18, %c0_19], %34 {strides = array<i32>} : memref<16x128xf32, #tpu.memory_space<vmem>>, vector<16x128xf32>,
    } else {
    }
    %c0 = arith.constant 0 : index
    %3 = memref.load %arg2[%c0] : memref<1xf32, #tpu.memory_space<smem>>
    %c0_1 = arith.constant 0 : index
    %c0_2 = arith.constant 0 : index
    %4 = vector.load %arg3[%c0_1, %c0_2] : memref<16x128xf32, #tpu.memory_space<vmem>>, vector<16x128xf32>
    %c0_3 = arith.constant 0 : index
    %c0_4 = arith.constant 0 : index
    %5 = vector.load %arg4[%c0_3, %c0_4] : memref<16x128xf32, #tpu.memory_space<vmem>>, vector<16x128xf32>
    %6 = math.log %4 : vector<16x128xf32>
    %cst = arith.constant -1.000000e+02 : f32
    %7 = vector.broadcast %cst : f32 to vector<16x128xf32>
    %8 = arith.maximumf %6, %7 : vector<16x128xf32>
    %cst_5 = arith.constant 0.000000e+00 : f32
    %9 = vector.broadcast %cst_5 : f32 to vector<16x128xf32>
    %10 = arith.subf %9, %4 : vector<16x128xf32>
    %11 = math.log1p %10 : vector<16x128xf32>
    %cst_6 = arith.constant -1.000000e+02 : f32
    %12 = vector.broadcast %cst_6 : f32 to vector<16x128xf32>
    %13 = arith.maximumf %11, %12 : vector<16x128xf32>
    %14 = arith.mulf %5, %8 : vector<16x128xf32>
    %cst_7 = arith.constant 1.000000e+00 : f32
    %15 = vector.broadcast %cst_7 : f32 to vector<16x128xf32>
    %16 = arith.subf %15, %5 : vector<16x128xf32>
    %17 = arith.mulf %16, %13 : vector<16x128xf32>
    %18 = arith.addf %14, %17 : vector<16x128xf32>
    %cst_8 = arith.constant 0.000000e+00 : f32
    %19 = vector.broadcast %cst_8 : f32 to vector<16x128xf32>
    %20 = arith.subf %19, %18 : vector<16x128xf32>
    %cst_9 = arith.constant 2.000000e+00 : f32
    %21 = arith.mulf %cst_9, %3 : f32
    %cst_10 = arith.constant 1.000000e+00 : f32
    %22 = arith.subf %cst_10, %21 : f32
    %23 = vector.broadcast %22 : f32 to vector<16x128xf32>
    %24 = arith.mulf %5, %23 : vector<16x128xf32>
    %25 = vector.broadcast %3 : f32 to vector<16x128xf32>
    %26 = arith.addf %25, %24 : vector<16x128xf32>
    %27 = arith.mulf %20, %26 : vector<16x128xf32>
    %c0_11 = arith.constant 0 : index
    %c0_12 = arith.constant 0 : index
    %28 = vector.load %arg6[%c0_11, %c0_12] : memref<16x128xf32, #tpu.memory_space<vmem>>, vector<16x128xf32>
    %29 = arith.addf %28, %27 : vector<16x128xf32>
    %c0_13 = arith.constant 0 : index
    %c0_14 = arith.constant 0 : index
    %30 = vector.load %arg6[%c0_13, %c0_14] : memref<16x128xf32, #tpu.memory_space<vmem>>, vector<16x128xf32>
    tpu.vector_store %arg6[%c0_13, %c0_14], %29 {strides = array<i32>} : memref<16x128xf32, #tpu.memory_space<vmem>>, vector<16x128xf32>,
    %c0_i32_15 = arith.constant 0 : i32
    %31 = arith.cmpi eq, %arg1, %c0_i32_15 : i32
    %32 = arith.extui %31 : i1 to i32
    %c0_i32_16 = arith.constant 0 : i32
    %33 = arith.cmpi ne, %32, %c0_i32_16 : i32
    scf.if %33 {
      %c0_17 = arith.constant 0 : index
      %c0_18 = arith.constant 0 : index
      %34 = vector.load %arg6[%c0_17, %c0_18] : memref<16x128xf32, #tpu.memory_space<vmem>>, vector<16x128xf32>
      %cst_19 = arith.constant dense<0.000000e+00> : vector<128xf32>
      %35 = vector.multi_reduction <add>, %34, %cst_19 [0] : vector<16x128xf32> to vector<128xf32>
      %36 = vector.shape_cast %35 : vector<128xf32> to vector<1x128xf32>
      %37 = vector.shape_cast %36 : vector<1x128xf32> to vector<1x1x128xf32>
      %c0_20 = arith.constant 0 : index
      %c0_21 = arith.constant 0 : index
      %c0_22 = arith.constant 0 : index
      %38 = vector.load %arg5[%c0_20, %c0_21, %c0_22] : memref<1x1x128xf32, #tpu.memory_space<vmem>>, vector<1x1x128xf32>
      tpu.vector_store %arg5[%c0_20, %c0_21, %c0_22], %37 {strides = array<i32>} : memref<1x1x128xf32, #tpu.memory_space<vmem>>, vector<1x1x128xf32>,
    } else {
    }
    return
  }
  func.func @transform_0(%arg0: i32, %arg1: i32) -> i32 {
    %c0_i32 = arith.constant 0 : i32
    %c0_i32_0 = arith.constant 0 : i32
    return %c0_i32 : i32
  }
  func.func @transform_1(%arg0: i32, %arg1: i32) -> (i32, i32) {
    %c1_i32 = arith.constant 1 : i32
    %0 = arith.muli %arg0, %c1_i32 : i32
    %1 = arith.addi %0, %arg1 : i32
    %c0_i32 = arith.constant 0 : i32
    %c0_i32_0 = arith.constant 0 : i32
    return %1, %c0_i32 : i32, i32
  }
  func.func @transform_2(%arg0: i32, %arg1: i32) -> (i32, i32) {
    %c1_i32 = arith.constant 1 : i32
    %0 = arith.muli %arg0, %c1_i32 : i32
    %1 = arith.addi %0, %arg1 : i32
    %c0_i32 = arith.constant 0 : i32
    %c0_i32_0 = arith.constant 0 : i32
    return %1, %c0_i32 : i32, i32
  }
  func.func @transform_3(%arg0: i32, %arg1: i32) -> (i32, i32, i32) {
    %c0_i32 = arith.constant 0 : i32
    %c0_i32_0 = arith.constant 0 : i32
    %c0_i32_1 = arith.constant 0 : i32
    return %arg0, %c0_i32, %c0_i32_0 : i32, i32, i32
  }
}

</mosaic_0001>

<llo_original>
// kernel: tpu_custom_call.1
$region0: #{tpu_custom_call.1}
  #allocation0 [shape = 'u32[]', space=smem, size = 0x4, offset = 0x4, fixed_abs, tag = 'smem constant byte address 0x4 - core index']
  #allocation1 [shape = 'u32[144,128]{1,0:T(1,128)}', space=vmem, size = 0x12000, scoped, tag = 'internal scratch']
  #allocation2 [shape = 'f32[16,128]{1,0:T(8,128)}', space=vmem, size = 0x2000, scoped, tag = 'scratch operand']
  #allocation3 [shape = 'f32[1]{0:T(128)S(6)}', space=smem, size = 0x200, scoped, tag = 'scoped memory for tpu_custom_call.1']
  %s0 = inlined_call_operand.<no memory space> [shape: f32[1], index: 0, kind: input, shape index: {}]
  %s1 = inlined_call_operand.hbm [shape: f32[16,128], index: 1, kind: input, shape index: {}]
  %s2 = inlined_call_operand.hbm [shape: f32[16,128], index: 2, kind: input, shape index: {}]
  %s3 = inlined_call_operand.hbm [shape: f32[1,1,128], index: 3, kind: output, shape index: {}]
  %s4 = sld [smem:[#allocation0]]
  $region38: #{tpu_custom_call.1} parent=0
    _
  %s6 = ssub.s32 1, %s4
  %s7 = scalar_select 0, %s6, %s4
  %8 = sst [smem:[#allocation3]] %s0
  $region1: #{tpu_custom_call.1} parent=0
    #allocation4 [shape = 'u8[8192]{0}', space=vmem, size = 0x2000, scoped, tag = 'input window, operand 1, single buffered']
    #allocation5 [shape = 's32[1]{0}', space=sflag, size = 0x4, scoped, tag = 'scoped memory for tpu_custom_call.1']
    #allocation6 [shape = 's32[1]{0}', space=sflag, size = 0x4, scoped, tag = 'scoped memory for tpu_custom_call.1']
    #allocation7 [shape = 'u8[8192]{0}', space=vmem, size = 0x2000, scoped, tag = 'input window, operand 2, single buffered']
    #allocation8 [shape = 's32[1]{0}', space=sflag, size = 0x4, scoped, tag = 'scoped memory for tpu_custom_call.1']
    #allocation9 [shape = 'u8[512]{0}', space=vmem, size = 0x400, scoped, tag = 'output window, operand 0, single buffered']
    %9 = vsyncpa [#allocation5], 0
    %10 = vsyncpa [#allocation8], 0
    %11 = vsyncpa [#allocation6], 0
    // Predicated region
    $region2: #{tpu_custom_call.1} parent=1 // pred_check
      _
    $region3: #{tpu_custom_call.1} parent=1 // pred_check_branch
      %13 = sbr.rel (0) target = $region5
    $region4: #{tpu_custom_call.1} parent=1 // pred_region
      _
    $region5: #{tpu_custom_call.1} parent=1 // pred_fallthru
      _
    // Predicated region
    $region6: #{tpu_custom_call.1} parent=1 // pred_check
      _
    $region7: #{tpu_custom_call.1} parent=1 // pred_check_branch
      %15 = sbr.rel (0) target = $region9
    $region8: #{tpu_custom_call.1} parent=1 // pred_region
      %s16 = sadd.s32 0, 0
      %s17 = smul.u32 2, %s16
      %s19 = ssub.s32 256, 256
      %20 = vsyncadd [#allocation5], %s19
      %s21 = smul.addr %s17, 128
      %s22 = scalar_lea.hbm %s1, %s21
      %s23 = sshll.u32 [#allocation4], 4
      %s24 = int_to_ptr.vmem [resolvable:$true] %s23
      %29 = dma.hbm_to_vmem [thread:$0]  %s22, 256, %s24, [#allocation5], 128, 128, 8
    $region9: #{tpu_custom_call.1} parent=1 // pred_fallthru
      _
    // Predicated region
    $region10: #{tpu_custom_call.1} parent=1 // pred_check
      _
    $region11: #{tpu_custom_call.1} parent=1 // pred_check_branch
      %31 = sbr.rel (0) target = $region13
    $region12: #{tpu_custom_call.1} parent=1 // pred_region
      %s32 = sadd.s32 0, 0
      %s33 = smul.u32 2, %s32
      %s35 = ssub.s32 256, 256
      %36 = vsyncadd [#allocation8], %s35
      %s37 = smul.addr %s33, 128
      %s38 = scalar_lea.hbm %s2, %s37
      %s39 = sshll.u32 [#allocation7], 4
      %s40 = int_to_ptr.vmem [resolvable:$true] %s39
      %45 = dma.hbm_to_vmem [thread:$0]  %s38, 256, %s40, [#allocation8], 128, 128, 8
    $region13: #{tpu_custom_call.1} parent=1 // pred_fallthru
      _
    // Predicated region
    $region14: #{tpu_custom_call.1} parent=1 // pred_check
      _
    $region15: #{tpu_custom_call.1} parent=1 // pred_check_branch
      %47 = sbr.rel (0) target = $region17
    $region16: #{tpu_custom_call.1} parent=1 // pred_region
      %48 = dma.done [#allocation5], 256
    $region17: #{tpu_custom_call.1} parent=1 // pred_fallthru
      _
    // Predicated region
    $region18: #{tpu_custom_call.1} parent=1 // pred_check
      _
    $region19: #{tpu_custom_call.1} parent=1 // pred_check_branch
      %50 = sbr.rel (0) target = $region21
    $region20: #{tpu_custom_call.1} parent=1 // pred_region
      %51 = dma.done [#allocation8], 256
    $region21: #{tpu_custom_call.1} parent=1 // pred_fallthru
      _
    %s52 = sadd.s32 0, 0
    %s53 = smul.u32 2, %s52
    %s54 = sadd.s32 0, 0
    %s55 = smul.u32 2, %s54
    %p56 = scmp.eq.s32.totalorder 0, 0
    // Predicated region
    $region22: #{tpu_custom_call.1} parent=1 // pred_check
      %p57 = pneg %p56
    $region23: #{tpu_custom_call.1} parent=1 // pred_check_branch
      %59 = sbr.rel (%p57) target = $region25
    $region24: #{tpu_custom_call.1} parent=1 // pred_region
      %60 = vst [vmem:[#allocation2] sm:$0xff] 0.0
      %61 = vst [vmem:[#allocation2 + $0x8] sm:$0xff] 0.0
    $region25: #{tpu_custom_call.1} parent=1 // pred_fallthru
      _
    %s62 = sld [smem:[#allocation3]]
    %v63 = vld [vmem:[#allocation4] sm:$0xff]
    %v64 = vld [vmem:[#allocation4 + $0x8] sm:$0xff]
    %v65 = vld [vmem:[#allocation7] sm:$0xff]
    %v66 = vld [vmem:[#allocation7 + $0x8] sm:$0xff]
    %v67 = vlog2.pop %v63
    %v68 = vmul.f32 %v67, 0.6931472
    %v69 = vlog2.pop %v64
    %v70 = vmul.f32 %v69, 0.6931472
    %v71 = vmax.f32 %v68, -100.0
    %v72 = vmax.f32 %v70, -100.0
    %v73 = vsub.f32 0.0, %v63
    %v74 = vsub.f32 0.0, %v64
    %v75 = vadd.f32 %v73, 1.0
    %v76 = vlog2.pop %v75
    %v77 = vmul.f32 %v76, 0.6931472
    %v78 = vmul.f32 -0.5, %v73
    %v79 = vadd.f32 %v78, 1.0
    %v80 = vmul.f32 %v79, %v73
    %v81 = vand.u32 2147483647, %v73
    %vm82 = vcmp.lt.f32.partialorder %v81, 0.0004427343
    %v83 = vsel %vm82, %v80, %v77
    %v84 = vadd.f32 %v74, 1.0
    %v85 = vlog2.pop %v84
    %v86 = vmul.f32 %v85, 0.6931472
    %v87 = vmul.f32 -0.5, %v74
    %v88 = vadd.f32 %v87, 1.0
    %v89 = vmul.f32 %v88, %v74
    %v90 = vand.u32 2147483647, %v74
    %vm91 = vcmp.lt.f32.partialorder %v90, 0.0004427343
    %v92 = vsel %vm91, %v89, %v86
    %v93 = vmax.f32 %v83, -100.0
    %v94 = vmax.f32 %v92, -100.0
    %v95 = vmul.f32 %v65, %v71
    %v96 = vmul.f32 %v66, %v72
    %v97 = vsub.f32 1.0, %v65
    %v98 = vsub.f32 1.0, %v66
    %v99 = vmul.f32 %v97, %v93
    %v100 = vmul.f32 %v98, %v94
    %v101 = vadd.f32 %v95, %v99
    %v102 = vadd.f32 %v96, %v100
    %v103 = vsub.f32 0.0, %v101
    %v104 = vsub.f32 0.0, %v102
    %s105 = smul.f32 %s62, 2.0
    %s106 = ssub.f32 1.0, %s105
    %v107 = vstv %s106
    %v108 = vmul.f32 %v65, %v107
    %v109 = vmul.f32 %v66, %v107
    %v110 = vstv %s62
    %v111 = vadd.f32 %v110, %v108
    %v112 = vadd.f32 %v110, %v109
    %v113 = vmul.f32 %v103, %v111
    %v114 = vmul.f32 %v104, %v112
    %v115 = vld [vmem:[#allocation2] sm:$0xff]
    %v116 = vld [vmem:[#allocation2 + $0x8] sm:$0xff]
    %v117 = vadd.f32 %v115, %v113
    %v118 = vadd.f32 %v116, %v114
    %119 = vst [vmem:[#allocation2] sm:$0xff] %v117
    %120 = vst [vmem:[#allocation2 + $0x8] sm:$0xff] %v118
    // Predicated region
    $region26: #{tpu_custom_call.1} parent=1 // pred_check
      %p121 = pneg %p56
    $region27: #{tpu_custom_call.1} parent=1 // pred_check_branch
      %123 = sbr.rel (%p121) target = $region29
    $region28: #{tpu_custom_call.1} parent=1 // pred_region
      %v124 = vld [vmem:[#allocation2] sm:$0xff]
      %v125 = vld [vmem:[#allocation2 + $0x8] sm:$0xff]
      %v126 = vadd.f32 %v124, %v125
      %v127 = vrot.slane %v126, 4
      %v128 = vadd.f32 %v126, %v127
      %v129 = vrot.slane %v128, 2
      %v130 = vadd.f32 %v128, %v129
      %v131 = vrot.slane %v130, 1
      %v132 = vadd.f32 %v130, %v131
      %133 = vst [vmem:[#allocation9] sm:$0x1] %v132
    $region29: #{tpu_custom_call.1} parent=1 // pred_fallthru
      _
    // Predicated region
    $region30: #{tpu_custom_call.1} parent=1 // pred_check
      _
    $region31: #{tpu_custom_call.1} parent=1 // pred_check_branch
      %135 = sbr.rel (0) target = $region33
    $region32: #{tpu_custom_call.1} parent=1 // pred_region
      %s137 = ssub.s32 16, 16
      %138 = vsyncadd [#allocation6], %s137
      %s140 = sshll.u32 [#allocation9], 4
      %s141 = int_to_ptr.vmem [resolvable:$true] %s140
      %143 = dma.vmem_to_hbm [thread:$0]  %s141, 16, %s3, [#allocation6]
    $region33: #{tpu_custom_call.1} parent=1 // pred_fallthru
      _
    // Predicated region
    $region34: #{tpu_custom_call.1} parent=1 // pred_check
      _
    $region35: #{tpu_custom_call.1} parent=1 // pred_check_branch
      %145 = sbr.rel (0) target = $region37
    $region36: #{tpu_custom_call.1} parent=1 // pred_region
      %146 = dma.done [#allocation6], 16
    $region37: #{tpu_custom_call.1} parent=1 // pred_fallthru
      _
    %147 = vsyncpa [#allocation5], 1
    %148 = vsyncpa [#allocation8], 1
    %149 = vsyncpa [#allocation6], 1

</llo_original>
